<compile_context>
chip_gen: v7x
topology: tpu7x:2x2x1
jax: 0.10.0
libtpu: 0.0.40
codegen_flags: <defaults>
</compile_context>

<pallas_src>
import numpy as np
import jax
import jax.numpy as jnp
from jax import lax
from jax.experimental import pallas as pl
from jax.experimental.pallas import tpu as pltpu


# ----------------------------------------------------------------------------- helpers

def _round_up(x, m):
    return ((x + m - 1) // m) * m


def _f_pad_nchw(x, pad):
    """Emulate torch.nn.functional.pad(x, pad) for 4D NCHW with a 4-element pad
    (left, right, top, bottom); negative entries crop."""
    left, right, top, bottom = pad
    x = jnp.pad(x, ((0, 0), (0, 0),
                    (max(top, 0), max(bottom, 0)),
                    (max(left, 0), max(right, 0))))
    H, W = x.shape[-2], x.shape[-1]
    t0 = -top if top < 0 else 0
    t1 = H + (bottom if bottom < 0 else 0)
    l0 = -left if left < 0 else 0
    l1 = W + (right if right < 0 else 0)
    return x[..., t0:t1, l0:l1]


def _apply_shifts(x):
    # torch: shifts = ((1,-1,0,0), (-1,1,0,0), (0,0,1,-1), (0,0,-1,1)); cat((x, *shifted), dim=1)
    shifts = ((1, -1, 0, 0), (-1, 1, 0, 0), (0, 0, 1, -1), (0, 0, -1, 1))
    return jnp.concatenate([x] + [_f_pad_nchw(x, s) for s in shifts], axis=1)


def _to_patches_flat(x, f_h, f_w, p1, p2):
    # 'b c (h p1) (w p2) -> (b h w) c p1 p2' -> flatten pixels to (Np, C*p1*p2)
    # (matches torch flatten order: row index = c*p1*p2 + n1*p2 + n2)
    B, C = x.shape[0], x.shape[1]
    x = x.reshape(B, C, f_h, p1, f_w, p2).transpose(0, 2, 4, 1, 3, 5)
    return x.reshape(B * f_h * f_w, C * p1 * p2)


def build_rfft2_matrix(C, p1, p2):
    """Real matrix T (C*p1*p2, 2*C*p1*(p2//2+1)) such that
       flatten(patch) @ T == flatten(cat(real(rfft2(patch, ortho)), imag(...)))
    with flatten orders identical to the torch module (row index = c*p1*p2 + n1*p2 + n2,
    column index = cc*p1*Wr + k1*Wr + k2, cc = [real 0..C-1, imag 0..C-1])."""
    Wr = p2 // 2 + 1
    n1 = np.arange(p1)
    n2 = np.arange(p2)
    k1 = np.arange(p1)
    k2 = np.arange(Wr)
    ang = (2.0 * np.pi * np.outer(k1, n1) / p1)[:, None, :, None] \
        + (2.0 * np.pi * np.outer(k2, n2) / p2)[None, :, None, :]        # [k1,k2,n1,n2]
    scale = 1.0 / np.sqrt(p1 * p2)                                        # 'ortho'
    cosm = (np.cos(ang) * scale).transpose(2, 3, 0, 1).reshape(p1 * p2, p1 * Wr)
    sinm = (-np.sin(ang) * scale).transpose(2, 3, 0, 1).reshape(p1 * p2, p1 * Wr)
    F_out = 2 * C * p1 * Wr
    T = np.zeros((C * p1 * p2, F_out), dtype=np.float32)
    for c in range(C):
        r0 = c * p1 * p2
        T[r0:r0 + p1 * p2, c * p1 * Wr:(c + 1) * p1 * Wr] = cosm
        T[r0:r0 + p1 * p2, (C + c) * p1 * Wr:(C + c + 1) * p1 * Wr] = sinm
    return jnp.asarray(T)


def _fold_weights(params, k_pad):
    """TW = T @ W folded once per call (exact: linear maps compose), zero-padded on the
    contraction dim to a lane multiple, cast to bf16 for the MXU."""
    tw = jnp.dot(params['dft'], params['w'], precision=lax.Precision.HIGHEST)  # (K, dim) f32
    tw = jnp.pad(tw, ((0, k_pad - tw.shape[0]), (0, 0)))
    return tw.astype(jnp.bfloat16)


def _prepare_inputs(params, x, f_h, f_w, p1, p2, shift):
    """Shared by the Pallas wrapper and the matched-precision reference so both see
    bit-identical bf16 matmul operands."""
    B = x.shape[0]
    if shift:
        x = _apply_shifts(x)
    # TODO(synk): for large B/Np, express the 4 shifts + patch rearrange via the x
    # BlockSpec index_map (offset reads of the same image) instead of materializing a
    # 5x concat + full transpose in HBM; negligible at the test size.
    x_flat = _to_patches_flat(x, f_h, f_w, p1, p2).astype(jnp.float32)   # (Np, K)
    Np, K = x_flat.shape
    K_pad = _round_up(K, 128)                                            # 320 -> 384
    x_bf16 = jnp.pad(x_flat, ((0, 0), (0, K_pad - K))).astype(jnp.bfloat16)
    tw_bf16 = _fold_weights(params, K_pad)                               # (K_pad, dim)
    return B, Np, K_pad, x_bf16, tw_bf16


# ----------------------------------------------------------------------------- kernel

def _ffc_embed_kernel(x_ref, tw_ref, bgb_ref, o_ref):
    # x: (TM, K_pad) bf16 patch pixels, tw: (K_pad, dim) bf16 folded DFT@Linear weight,
    # bgb: (8, dim) f32 [row0 = Linear bias, row1 = LN gamma, row2 = LN beta].
    # Single fused MXU pass: rfft2 + cat + flatten + Linear in one matmul.
    lat = jnp.dot(x_ref[...], tw_ref[...], preferred_element_type=jnp.float32)
    lat = jnp.maximum(lat + bgb_ref[0:1, :], 0.0)                        # bias + ReLU (f32)
    # LayerNorm(dim): one-sweep stats (sum and sum-of-squares), var = E[x^2] - mu^2.
    inv_d = 1.0 / lat.shape[-1]
    mu = jnp.sum(lat, axis=-1, keepdims=True) * inv_d
    ex2 = jnp.sum(lat * lat, axis=-1, keepdims=True) * inv_d
    var = ex2 - mu * mu
    o_ref[...] = (lat - mu) * lax.rsqrt(var + 1e-5) * bgb_ref[1:2, :] + bgb_ref[2:3, :]


def ffc_patch_embeding_pallas(params, x, f_h, f_w, p1, p2, dim, shift=True):
    B, Np, K_pad, x_bf16, tw_bf16 = _prepare_inputs(params, x, f_h, f_w, p1, p2, shift)

    # Row tiling: one fat tile when everything fits in <= 256 rows (grid=(1,)),
    # else 256-row tiles (>= MXU height on every generation).
    ROW_CAP = 256
    Np_pad = _round_up(Np, 16)                 # bf16-friendly sublane multiple
    tm = min(Np_pad, ROW_CAP)
    Np_pad = _round_up(Np_pad, tm)
    if Np_pad != Np:
        x_bf16 = jnp.pad(x_bf16, ((0, Np_pad - Np), (0, 0)))

    # Pack Linear bias / LN gamma / LN beta into one aligned (8, dim) block.
    bgb = (jnp.zeros((8, dim), jnp.float32)
           .at[0].set(params['b'])
           .at[1].set(params['g'])
           .at[2].set(params['bt']))

    grid = (Np_pad // tm,)
    # Megacore: only shard across the two v7x TensorCores when each core gets a fat
    # (>=256-row) chunk; otherwise splitting just duplicates the weight DMA.
    dims = ("parallel",) if grid[0] >= 2 else ("arbitrary",)

    out = pl.pallas_call(
        _ffc_embed_kernel,
        out_shape=jax.ShapeDtypeStruct((Np_pad, dim), jnp.float32),
        grid_spec=pltpu.PrefetchScalarGridSpec(
            num_scalar_prefetch=0,
            grid=grid,
            in_specs=[
                pl.BlockSpec((tm, K_pad), lambda i: (i, 0)),     # patch pixels (bf16)
                pl.BlockSpec((K_pad, dim), lambda i: (0, 0)),    # folded DFT@W (bf16)
                pl.BlockSpec((8, dim), lambda i: (0, 0)),        # bias/gamma/beta (f32)
            ],
            out_specs=pl.BlockSpec((tm, dim), lambda i: (i, 0)),
        ),
        compiler_params=pltpu.CompilerParams(dimension_semantics=dims),
    )(x_bf16, tw_bf16, bgb)

    out = out[:Np]
    # '(b h w) c -> b (h w) c'
    return out.reshape(B, f_h * f_w, dim)


# ----------------------------------------------------------------------------- params

def init_params(key, C, p1, p2, dim):
    Wr = p2 // 2 + 1
    F_ = 2 * C * p1 * Wr
    kw, kb = jax.random.split(key)
    bound = 1.0 / np.sqrt(F_)             # torch nn.Linear default init range
    return dict(
        dft=build_rfft2_matrix(C, p1, p2),                            # constant (not a parameter)
        w=jax.random.uniform(kw, (F_, dim), jnp.float32, -bound, bound),
        b=jax.random.uniform(kb, (dim,), jnp.float32, -bound, bound),
        g=jnp.ones((dim,), jnp.float32),                              # LayerNorm weight
        bt=jnp.zeros((dim,), jnp.float32),                            # LayerNorm bias
    )


# ----------------------------------------------------------------------------- references

def _ln_np(lat, g, bt, dim, B, f_hw):
    mu = lat.mean(-1, keepdims=True)
    var = ((lat - mu) ** 2).mean(-1, keepdims=True)
    out = (lat - mu) / np.sqrt(var + 1e-5) * g + bt
    return out.reshape(B, f_hw, dim)


def reference_forward_exact(params, x, f_h, f_w, p1, p2, dim, shift=True):
    """Exact float64 numpy replica of the torch module (rfft2 -> Linear -> ReLU -> LN)."""
    B = x.shape[0]
    if shift:
        x = _apply_shifts(x)
    C = x.shape[1]
    patches = np.asarray(x, np.float64).reshape(B, C, f_h, p1, f_w, p2)
    patches = patches.transpose(0, 2, 4, 1, 3, 5).reshape(B * f_h * f_w, C, p1, p2)
    ffted = np.fft.rfftn(patches, s=(p1, p2), axes=(-2, -1), norm='ortho')
    feat = np.concatenate([ffted.real, ffted.imag], axis=1).reshape(patches.shape[0], -1)
    lat = feat @ np.asarray(params['w'], np.float64) + np.asarray(params['b'], np.float64)
    lat = np.maximum(lat, 0.0)
    return _ln_np(lat, np.asarray(params['g'], np.float64),
                  np.asarray(params['bt'], np.float64), dim, B, f_h * f_w)


def reference_forward_matched(params, x, f_h, f_w, p1, p2, dim, shift=True):
    """Matched-precision reference: identical bf16-rounded matmul operands as the
    kernel, exact float64 accumulation.  A tight tolerance here catches any
    layout/transpose/weight-fold bug independently of bf16 quantization drift."""
    B, Np, K_pad, x_bf16, tw_bf16 = _prepare_inputs(params, x, f_h, f_w, p1, p2, shift)
    xn = np.asarray(x_bf16.astype(jnp.float32), np.float64)[:Np]
    twn = np.asarray(tw_bf16.astype(jnp.float32), np.float64)
    lat = xn @ twn + np.asarray(params['b'], np.float64)
    lat = np.maximum(lat, 0.0)
    return _ln_np(lat, np.asarray(params['g'], np.float64),
                  np.asarray(params['bt'], np.float64), dim, B, f_h * f_w)


# ----------------------------------------------------------------------------- main

if __name__ == "__main__":
    # small shapes consistent with the module: f_height=f_width=4, patch 8x8, dim=256
    B, f_h, f_w, p1, p2, dim = 2, 4, 4, 8, 8, 256
    shift = True
    C = 5 if shift else 1

    key = jax.random.PRNGKey(0)
    kx, kp = jax.random.split(key)
    x = jax.random.normal(kx, (B, 1, f_h * p1, f_w * p2), jnp.float32)   # (2, 1, 32, 32)

    params = init_params(kp, C, p1, p2, dim)

    out = ffc_patch_embeding_pallas(params, x, f_h, f_w, p1, p2, dim, shift=shift)
    jax.block_until_ready(out)
    assert out.shape == (B, f_h * f_w, dim), out.shape
    out_np = np.asarray(out, np.float64)

    # Tight check (layout / weight-fold correctness): same bf16 operands, exact accumulate.
    ref_m = reference_forward_matched(params, x, f_h, f_w, p1, p2, dim, shift=shift)
    err_m = float(np.max(np.abs(out_np - ref_m)))
    assert err_m < 2e-3, f"matched-precision max abs err: {err_m}"

    # Loose check vs the exact f64 module semantics: bounds bf16 quantization drift only.
    ref_e = reference_forward_exact(params, x, f_h, f_w, p1, p2, dim, shift=shift)
    err_e = float(np.max(np.abs(out_np - ref_e)))
    assert err_e < 8e-2, f"exact-reference max abs err (bf16 drift): {err_e}"

    print("KERNEL_OK")
</pallas_src>

<mosaic_0001>
module attributes {stable_mosaic.version = 11 : i64} {
  func.func @_ffc_embed_kernel(%arg0: i32, %arg1: memref<32x384xbf16, #tpu.memory_space<vmem>>, %arg2: memref<384x256xbf16, #tpu.memory_space<vmem>>, %arg3: memref<8x256xf32, #tpu.memory_space<vmem>>, %arg4: memref<32x256xf32, #tpu.memory_space<vmem>>) attributes {dimension_semantics = [#tpu.dimension_semantics<arbitrary>], iteration_bounds = array<i64: 1>, scalar_prefetch = 0 : i64, scratch_operands = 0 : i64, tpu.core_type = #tpu.core_type<tc>, window_params = [{transform_indices = @transform_0, window_bounds = array<i64: 32, 384>}, {pipeline_mode = #tpu.pipeline_mode<synchronous>, transform_indices = @transform_1, window_bounds = array<i64: 384, 256>}, {pipeline_mode = #tpu.pipeline_mode<synchronous>, transform_indices = @transform_2, window_bounds = array<i64: 8, 256>}, {transform_indices = @transform_3, window_bounds = array<i64: 32, 256>}]} {
    %c0 = arith.constant 0 : index
    %c0_0 = arith.constant 0 : index
    %0 = vector.load %arg1[%c0, %c0_0] : memref<32x384xbf16, #tpu.memory_space<vmem>>, vector<32x384xbf16>
    %c0_1 = arith.constant 0 : index
    %c0_2 = arith.constant 0 : index
    %1 = vector.load %arg2[%c0_1, %c0_2] : memref<384x256xbf16, #tpu.memory_space<vmem>>, vector<384x256xbf16>
    %cst = arith.constant dense<0.000000e+00> : vector<32x256xf32>
    %2 = tpu.matmul %0, %1, %cst {dimension_numbers = #tpu.dot_dimension_numbers<[1], [0], [0], [1], [0, 0, 1, 1], [], []>} : vector<32x384xbf16>, vector<384x256xbf16>, vector<32x256xf32> -> vector<32x256xf32>
    %c0_3 = arith.constant 0 : index
    %c0_4 = arith.constant 0 : index
    %3 = vector.load %arg3[%c0_3, %c0_4] : memref<8x256xf32, #tpu.memory_space<vmem>>, vector<1x256xf32>
    %4 = vector.broadcast %3 : vector<1x256xf32> to vector<32x256xf32>
    %5 = arith.addf %2, %4 : vector<32x256xf32>
    %cst_5 = arith.constant 0.000000e+00 : f32
    %6 = vector.broadcast %cst_5 : f32 to vector<32x256xf32>
    %7 = arith.maximumf %5, %6 : vector<32x256xf32>
    %cst_6 = arith.constant dense<0.000000e+00> : vector<32xf32>
    %8 = vector.multi_reduction <add>, %7, %cst_6 [1] : vector<32x256xf32> to vector<32xf32>
    %9 = vector.shape_cast %8 : vector<32xf32> to vector<32x1xf32>
    %cst_7 = arith.constant 3.906250e-03 : f32
    %10 = vector.broadcast %cst_7 : f32 to vector<32x1xf32>
    %11 = arith.mulf %9, %10 : vector<32x1xf32>
    %12 = arith.mulf %7, %7 : vector<32x256xf32>
    %cst_8 = arith.constant dense<0.000000e+00> : vector<32xf32>
    %13 = vector.multi_reduction <add>, %12, %cst_8 [1] : vector<32x256xf32> to vector<32xf32>
    %14 = vector.shape_cast %13 : vector<32xf32> to vector<32x1xf32>
    %cst_9 = arith.constant 3.906250e-03 : f32
    %15 = vector.broadcast %cst_9 : f32 to vector<32x1xf32>
    %16 = arith.mulf %14, %15 : vector<32x1xf32>
    %17 = arith.mulf %11, %11 : vector<32x1xf32>
    %18 = arith.subf %16, %17 : vector<32x1xf32>
    %19 = vector.broadcast %11 : vector<32x1xf32> to vector<32x256xf32>
    %20 = arith.subf %7, %19 : vector<32x256xf32>
    %cst_10 = arith.constant 9.99999974E-6 : f32
    %21 = vector.broadcast %cst_10 : f32 to vector<32x1xf32>
    %22 = arith.addf %18, %21 : vector<32x1xf32>
    %23 = math.rsqrt %22 : vector<32x1xf32>
    %24 = vector.broadcast %23 : vector<32x1xf32> to vector<32x256xf32>
    %25 = arith.mulf %20, %24 : vector<32x256xf32>
    %c1 = arith.constant 1 : index
    %c0_11 = arith.constant 0 : index
    %26 = vector.load %arg3[%c1, %c0_11] : memref<8x256xf32, #tpu.memory_space<vmem>>, vector<1x256xf32>
    %27 = vector.broadcast %26 : vector<1x256xf32> to vector<32x256xf32>
    %28 = arith.mulf %25, %27 : vector<32x256xf32>
    %c2 = arith.constant 2 : index
    %c0_12 = arith.constant 0 : index
    %29 = vector.load %arg3[%c2, %c0_12] : memref<8x256xf32, #tpu.memory_space<vmem>>, vector<1x256xf32>
    %30 = vector.broadcast %29 : vector<1x256xf32> to vector<32x256xf32>
    %31 = arith.addf %28, %30 : vector<32x256xf32>
    %c0_13 = arith.constant 0 : index
    %c0_14 = arith.constant 0 : index
    %32 = vector.load %arg4[%c0_13, %c0_14] : memref<32x256xf32, #tpu.memory_space<vmem>>, vector<32x256xf32>
    tpu.vector_store %arg4[%c0_13, %c0_14], %31 {strides = array<i32>} : memref<32x256xf32, #tpu.memory_space<vmem>>, vector<32x256xf32>,
    return
  }
  func.func @transform_0(%arg0: i32) -> (i32, i32) {
    %c0_i32 = arith.constant 0 : i32
    %c0_i32_0 = arith.constant 0 : i32
    return %arg0, %c0_i32 : i32, i32
  }
  func.func @transform_1(%arg0: i32) -> (i32, i32) {
    %c0_i32 = arith.constant 0 : i32
    %c0_i32_0 = arith.constant 0 : i32
    %c0_i32_1 = arith.constant 0 : i32
    return %c0_i32, %c0_i32_0 : i32, i32
  }
  func.func @transform_2(%arg0: i32) -> (i32, i32) {
    %c0_i32 = arith.constant 0 : i32
    %c0_i32_0 = arith.constant 0 : i32
    %c0_i32_1 = arith.constant 0 : i32
    return %c0_i32, %c0_i32_0 : i32, i32
  }
  func.func @transform_3(%arg0: i32) -> (i32, i32) {
    %c0_i32 = arith.constant 0 : i32
    %c0_i32_0 = arith.constant 0 : i32
    return %arg0, %c0_i32 : i32, i32
  }
}

</mosaic_0001>

<llo_original>
// kernel: tpu_custom_call.1
$region0: #{tpu_custom_call.1}
  #allocation0 [shape = 'u32[]', space=smem, size = 0x4, offset = 0x4, fixed_abs, tag = 'smem constant byte address 0x4 - core index']
  #allocation1 [shape = 'u32[144,128]{1,0:T(1,128)}', space=vmem, size = 0x12000, scoped, tag = 'internal scratch']
  %s0 = inlined_call_operand.hbm [shape: bf16[32,384], index: 0, kind: input, shape index: {}]
  %s1 = inlined_call_operand.hbm [shape: bf16[384,256], index: 1, kind: input, shape index: {}]
  %s2 = inlined_call_operand.hbm [shape: f32[8,256], index: 2, kind: input, shape index: {}]
  %s3 = inlined_call_operand.hbm [shape: f32[32,256], index: 3, kind: output, shape index: {}]
  %s4 = sld [smem:[#allocation0]]
  $region34: #{tpu_custom_call.1} parent=0
    _
  %s6 = ssub.s32 1, %s4
  %s7 = scalar_select 0, %s6, %s4
  $region1: #{tpu_custom_call.1} parent=0
    #allocation2 [shape = 'u8[24576]{0}', space=vmem, size = 0x6000, scoped, tag = 'input window, operand 0, single buffered']
    #allocation3 [shape = 's32[1]{0}', space=sflag, size = 0x4, scoped, tag = 'scoped memory for tpu_custom_call.1']
    #allocation4 [shape = 's32[1]{0}', space=sflag, size = 0x4, scoped, tag = 'scoped memory for tpu_custom_call.1']
    #allocation5 [shape = 'u8[196608]{0}', space=vmem, size = 0x30000, scoped, tag = 'input window, operand 1, single buffered']
    #allocation6 [shape = 's32[1]{0}', space=sflag, size = 0x4, scoped, tag = 'scoped memory for tpu_custom_call.1']
    #allocation7 [shape = 'u8[8192]{0}', space=vmem, size = 0x2000, scoped, tag = 'input window, operand 2, single buffered']
    #allocation8 [shape = 'u8[32768]{0}', space=vmem, size = 0x8000, scoped, tag = 'output window, operand 0, single buffered']
    %8 = vsyncpa [#allocation3], 0
    %9 = vsyncpa [#allocation6], 0
    %10 = vsyncpa [#allocation4], 0
    // Predicated region
    $region2: #{tpu_custom_call.1} parent=1 // pred_check
      _
    $region3: #{tpu_custom_call.1} parent=1 // pred_check_branch
      %12 = sbr.rel (0) target = $region5
    $region4: #{tpu_custom_call.1} parent=1 // pred_region
      %s14 = ssub.s32 768, 768
      %15 = vsyncadd [#allocation3], %s14
      %s16 = sshll.u32 [#allocation2], 4
      %s17 = int_to_ptr.vmem [resolvable:$true] %s16
      %22 = dma.hbm_to_vmem [thread:$0]  %s0, 768, %s17, [#allocation3], 192, 192, 12
    $region5: #{tpu_custom_call.1} parent=1 // pred_fallthru
      _
    // Predicated region
    $region6: #{tpu_custom_call.1} parent=1 // pred_check
      _
    $region7: #{tpu_custom_call.1} parent=1 // pred_check_branch
      %24 = sbr.rel (0) target = $region9
    $region8: #{tpu_custom_call.1} parent=1 // pred_region
      %s26 = ssub.s32 6144, 6144
      %27 = vsyncadd [#allocation6], %s26
      %s28 = sshll.u32 [#allocation5], 4
      %s29 = int_to_ptr.vmem [resolvable:$true] %s28
      %34 = dma.hbm_to_vmem [thread:$0]  %s1, 6144, %s29, [#allocation6], 128, 128, 8
    $region9: #{tpu_custom_call.1} parent=1 // pred_fallthru
      _
    // Predicated region
    $region10: #{tpu_custom_call.1} parent=1 // pred_check
      _
    $region11: #{tpu_custom_call.1} parent=1 // pred_check_branch
      %36 = sbr.rel (0) target = $region13
    $region12: #{tpu_custom_call.1} parent=1 // pred_region
      %s38 = ssub.s32 256, 256
      %39 = vsyncadd [#allocation6], %s38
      %s41 = sshll.u32 [#allocation7], 4
      %s42 = int_to_ptr.vmem [resolvable:$true] %s41
      %44 = dma.hbm_to_vmem [thread:$0]  %s2, 256, %s42, [#allocation6]
    $region13: #{tpu_custom_call.1} parent=1 // pred_fallthru
      _
    // Predicated region
    $region14: #{tpu_custom_call.1} parent=1 // pred_check
      _
    $region15: #{tpu_custom_call.1} parent=1 // pred_check_branch
      %46 = sbr.rel (0) target = $region17
    $region16: #{tpu_custom_call.1} parent=1 // pred_region
      %47 = dma.done [#allocation3], 768
    $region17: #{tpu_custom_call.1} parent=1 // pred_fallthru
      _
    // Predicated region
    $region18: #{tpu_custom_call.1} parent=1 // pred_check
      _
    $region19: #{tpu_custom_call.1} parent=1 // pred_check_branch
      %49 = sbr.rel (0) target = $region21
    $region20: #{tpu_custom_call.1} parent=1 // pred_region
      %50 = dma.done [#allocation6], 6144
    $region21: #{tpu_custom_call.1} parent=1 // pred_fallthru
      _
    // Predicated region
    $region22: #{tpu_custom_call.1} parent=1 // pred_check
      _
    $region23: #{tpu_custom_call.1} parent=1 // pred_check_branch
      %52 = sbr.rel (0) target = $region25
    $region24: #{tpu_custom_call.1} parent=1 // pred_region
      %53 = dma.done [#allocation6], 256
    $region25: #{tpu_custom_call.1} parent=1 // pred_fallthru
      _
    %v55 = vld [vmem:[#allocation2] sm:$0xff]
    %v56 = vld [vmem:[#allocation2 + $0x8] sm:$0xf]
    %v57 = vld [vmem:[#allocation2 + $0xc] sm:$0xff]
    %v58 = vld [vmem:[#allocation2 + $0x14] sm:$0xf]
    %v59 = vld [vmem:[#allocation2 + $0x18] sm:$0xff]
    %v60 = vld [vmem:[#allocation2 + $0x20] sm:$0xf]
    %v61 = vld [vmem:[#allocation2 + $0x24] sm:$0xff]
    %v62 = vld [vmem:[#allocation2 + $0x2c] sm:$0xf]
    %v63 = vld [vmem:[#allocation5] sm:$0xff]
    %v64 = vld [vmem:[#allocation5 + $0x8] sm:$0xff]
    %v65 = vld [vmem:[#allocation5 + $0x10] sm:$0xff]
    %v66 = vld [vmem:[#allocation5 + $0x18] sm:$0xff]
    %v67 = vld [vmem:[#allocation5 + $0x20] sm:$0xff]
    %v68 = vld [vmem:[#allocation5 + $0x28] sm:$0xff]
    %v69 = vld [vmem:[#allocation5 + $0x30] sm:$0xff]
    %v70 = vld [vmem:[#allocation5 + $0x38] sm:$0xff]
    %v71 = vld [vmem:[#allocation5 + $0x40] sm:$0xff]
    %v72 = vld [vmem:[#allocation5 + $0x48] sm:$0xff]
    %v73 = vld [vmem:[#allocation5 + $0x50] sm:$0xff]
    %v74 = vld [vmem:[#allocation5 + $0x58] sm:$0xff]
    %v75 = vld [vmem:[#allocation5 + $0x60] sm:$0xff]
    %v76 = vld [vmem:[#allocation5 + $0x68] sm:$0xff]
    %v77 = vld [vmem:[#allocation5 + $0x70] sm:$0xff]
    %v78 = vld [vmem:[#allocation5 + $0x78] sm:$0xff]
    %v79 = vld [vmem:[#allocation5 + $0x80] sm:$0xff]
    %v80 = vld [vmem:[#allocation5 + $0x88] sm:$0xff]
    %v81 = vld [vmem:[#allocation5 + $0x90] sm:$0xff]
    %v82 = vld [vmem:[#allocation5 + $0x98] sm:$0xff]
    %v83 = vld [vmem:[#allocation5 + $0xa0] sm:$0xff]
    %v84 = vld [vmem:[#allocation5 + $0xa8] sm:$0xff]
    %v85 = vld [vmem:[#allocation5 + $0xb0] sm:$0xff]
    %v86 = vld [vmem:[#allocation5 + $0xb8] sm:$0xff]
    %v87 = vld [vmem:[#allocation5 + $0xc0] sm:$0xff]
    %v88 = vld [vmem:[#allocation5 + $0xc8] sm:$0xff]
    %v89 = vld [vmem:[#allocation5 + $0xd0] sm:$0xff]
    %v90 = vld [vmem:[#allocation5 + $0xd8] sm:$0xff]
    %v91 = vld [vmem:[#allocation5 + $0xe0] sm:$0xff]
    %v92 = vld [vmem:[#allocation5 + $0xe8] sm:$0xff]
    %v93 = vld [vmem:[#allocation5 + $0xf0] sm:$0xff]
    %v94 = vld [vmem:[#allocation5 + $0xf8] sm:$0xff]
    %v95 = vld [vmem:[#allocation5 + $0x100] sm:$0xff]
    %v96 = vld [vmem:[#allocation5 + $0x108] sm:$0xff]
    %v97 = vld [vmem:[#allocation5 + $0x110] sm:$0xff]
    %v98 = vld [vmem:[#allocation5 + $0x118] sm:$0xff]
    %v99 = vld [vmem:[#allocation5 + $0x120] sm:$0xff]
    %v100 = vld [vmem:[#allocation5 + $0x128] sm:$0xff]
    %v101 = vld [vmem:[#allocation5 + $0x130] sm:$0xff]
    %v102 = vld [vmem:[#allocation5 + $0x138] sm:$0xff]
    %v103 = vld [vmem:[#allocation5 + $0x140] sm:$0xff]
    %v104 = vld [vmem:[#allocation5 + $0x148] sm:$0xff]
    %v105 = vld [vmem:[#allocation5 + $0x150] sm:$0xff]
    %v106 = vld [vmem:[#allocation5 + $0x158] sm:$0xff]
    %v107 = vld [vmem:[#allocation5 + $0x160] sm:$0xff]
    %v108 = vld [vmem:[#allocation5 + $0x168] sm:$0xff]
    %v109 = vld [vmem:[#allocation5 + $0x170] sm:$0xff]
    %v110 = vld [vmem:[#allocation5 + $0x178] sm:$0xff]
    %v111 = vld [vmem:[#allocation7] ss:$8 sm:$0x3]
    %v113 = vlaneseq
    %v114 = vshrl.u32 %v113, 7
    %v115 = vsub.s32 0, %v114
    %v116 = vrot.slane %v111, %v115
    %v117 = vlaneseq
    %v118 = vshrl.u32 %v117, 7
    %v119 = vsub.s32 1, %v118
    %v120 = vrot.slane %v111, %v119
    %v131 = vunpack.c.l.b16 %v55
    %v132 = vunpack.c.h.b16 %v55
    %v133 = vunpack.c.l.b16 %v56
    %v134 = vunpack.c.l.b16 %v57
    %v135 = vunpack.c.h.b16 %v57
    %v136 = vunpack.c.l.b16 %v58
    %v137 = vunpack.c.l.b16 %v59
    %v138 = vunpack.c.h.b16 %v59
    %v139 = vunpack.c.l.b16 %v60
    %v140 = vunpack.c.l.b16 %v61
    %v141 = vunpack.c.h.b16 %v61
    %v142 = vunpack.c.l.b16 %v62
    %v143 = vpack.c.b16 %v134, %v131
    %v144 = vpack.c.b16 %v135, %v132
    %v145 = vpack.c.b16 %v136, %v133
    %v146 = vpack.c.b16 %v140, %v137
    %v147 = vpack.c.b16 %v141, %v138
    %v148 = vpack.c.b16 %v142, %v139
    %v203 = vunpack.c.l.b16 %v63
    %v204 = vunpack.c.h.b16 %v63
    %v205 = vunpack.c.l.b16 %v64
    %v206 = vunpack.c.h.b16 %v64
    %v207 = vunpack.c.l.b16 %v65
    %v208 = vunpack.c.h.b16 %v65
    %v209 = vunpack.c.l.b16 %v66
    %v210 = vunpack.c.h.b16 %v66
    %v211 = vunpack.c.l.b16 %v67
    %v212 = vunpack.c.h.b16 %v67
    %v213 = vunpack.c.l.b16 %v68
    %v214 = vunpack.c.h.b16 %v68
    %v215 = vunpack.c.l.b16 %v69
    %v216 = vunpack.c.h.b16 %v69
    %v217 = vunpack.c.l.b16 %v70
    %v218 = vunpack.c.h.b16 %v70
    %v219 = vunpack.c.l.b16 %v71
    %v220 = vunpack.c.h.b16 %v71
    %v221 = vunpack.c.l.b16 %v72
    %v222 = vunpack.c.h.b16 %v72
    %v223 = vunpack.c.l.b16 %v73
    %v224 = vunpack.c.h.b16 %v73
    %v225 = vunpack.c.l.b16 %v74
    %v226 = vunpack.c.h.b16 %v74
    %v227 = vunpack.c.l.b16 %v75
    %v228 = vunpack.c.h.b16 %v75
    %v229 = vunpack.c.l.b16 %v76
    %v230 = vunpack.c.h.b16 %v76
    %v231 = vunpack.c.l.b16 %v77
    %v232 = vunpack.c.h.b16 %v77
    %v233 = vunpack.c.l.b16 %v78
    %v234 = vunpack.c.h.b16 %v78
    %v235 = vunpack.c.l.b16 %v79
    %v236 = vunpack.c.h.b16 %v79
    %v237 = vunpack.c.l.b16 %v80
    %v238 = vunpack.c.h.b16 %v80
    %v239 = vunpack.c.l.b16 %v81
    %v240 = vunpack.c.h.b16 %v81
    %v241 = vunpack.c.l.b16 %v82
    %v242 = vunpack.c.h.b16 %v82
    %v243 = vunpack.c.l.b16 %v83
    %v244 = vunpack.c.h.b16 %v83
    %v245 = vunpack.c.l.b16 %v84
    %v246 = vunpack.c.h.b16 %v84
    %v247 = vunpack.c.l.b16 %v85
    %v248 = vunpack.c.h.b16 %v85
    %v249 = vunpack.c.l.b16 %v86
    %v250 = vunpack.c.h.b16 %v86
    %v251 = vunpack.c.l.b16 %v87
    %v252 = vunpack.c.h.b16 %v87
    %v253 = vunpack.c.l.b16 %v88
    %v254 = vunpack.c.h.b16 %v88
    %v255 = vunpack.c.l.b16 %v89
    %v256 = vunpack.c.h.b16 %v89
    %v257 = vunpack.c.l.b16 %v90
    %v258 = vunpack.c.h.b16 %v90
    %v259 = vunpack.c.l.b16 %v91
    %v260 = vunpack.c.h.b16 %v91
    %v261 = vunpack.c.l.b16 %v92
    %v262 = vunpack.c.h.b16 %v92
    %v263 = vunpack.c.l.b16 %v93
    %v264 = vunpack.c.h.b16 %v93
    %v265 = vunpack.c.l.b16 %v94
    %v266 = vunpack.c.h.b16 %v94
    %v267 = vunpack.c.l.b16 %v95
    %v268 = vunpack.c.h.b16 %v95
    %v269 = vunpack.c.l.b16 %v96
    %v270 = vunpack.c.h.b16 %v96
    %v271 = vunpack.c.l.b16 %v97
    %v272 = vunpack.c.h.b16 %v97
    %v273 = vunpack.c.l.b16 %v98
    %v274 = vunpack.c.h.b16 %v98
    %v275 = vunpack.c.l.b16 %v99
    %v276 = vunpack.c.h.b16 %v99
    %v277 = vunpack.c.l.b16 %v100
    %v278 = vunpack.c.h.b16 %v100
    %v279 = vunpack.c.l.b16 %v101
    %v280 = vunpack.c.h.b16 %v101
    %v281 = vunpack.c.l.b16 %v102
    %v282 = vunpack.c.h.b16 %v102
    %v283 = vunpack.c.l.b16 %v103
    %v284 = vunpack.c.h.b16 %v103
    %v285 = vunpack.c.l.b16 %v104
    %v286 = vunpack.c.h.b16 %v104
    %v287 = vunpack.c.l.b16 %v105
    %v288 = vunpack.c.h.b16 %v105
    %v289 = vunpack.c.l.b16 %v106
    %v290 = vunpack.c.h.b16 %v106
    %v291 = vunpack.c.l.b16 %v107
    %v292 = vunpack.c.h.b16 %v107
    %v293 = vunpack.c.l.b16 %v108
    %v294 = vunpack.c.h.b16 %v108
    %v295 = vunpack.c.l.b16 %v109
    %v296 = vunpack.c.h.b16 %v109
    %v297 = vunpack.c.l.b16 %v110
    %v298 = vunpack.c.h.b16 %v110
    %v299 = vpack.c.b16 %v205, %v203
    %v300 = vpack.c.b16 %v206, %v204
    %v301 = vpack.c.b16 %v209, %v207
    %v302 = vpack.c.b16 %v210, %v208
    %v303 = vpack.c.b16 %v213, %v211
    %v304 = vpack.c.b16 %v214, %v212
    %v305 = vpack.c.b16 %v217, %v215
    %v306 = vpack.c.b16 %v218, %v216
    %v307 = vpack.c.b16 %v221, %v219
    %v308 = vpack.c.b16 %v222, %v220
    %v309 = vpack.c.b16 %v225, %v223
    %v310 = vpack.c.b16 %v226, %v224
    %v311 = vpack.c.b16 %v229, %v227
    %v312 = vpack.c.b16 %v230, %v228
    %v313 = vpack.c.b16 %v233, %v231
    %v314 = vpack.c.b16 %v234, %v232
    %v315 = vpack.c.b16 %v237, %v235
    %v316 = vpack.c.b16 %v238, %v236
    %v317 = vpack.c.b16 %v241, %v239
    %v318 = vpack.c.b16 %v242, %v240
    %v319 = vpack.c.b16 %v245, %v243
    %v320 = vpack.c.b16 %v246, %v244
    %v321 = vpack.c.b16 %v249, %v247
    %v322 = vpack.c.b16 %v250, %v248
    %v323 = vpack.c.b16 %v253, %v251
    %v324 = vpack.c.b16 %v254, %v252
    %v325 = vpack.c.b16 %v257, %v255
    %v326 = vpack.c.b16 %v258, %v256
    %v327 = vpack.c.b16 %v261, %v259
    %v328 = vpack.c.b16 %v262, %v260
    %v329 = vpack.c.b16 %v265, %v263
    %v330 = vpack.c.b16 %v266, %v264
    %v331 = vpack.c.b16 %v269, %v267
    %v332 = vpack.c.b16 %v270, %v268
    %v333 = vpack.c.b16 %v273, %v271
    %v334 = vpack.c.b16 %v274, %v272
    %v335 = vpack.c.b16 %v277, %v275
    %v336 = vpack.c.b16 %v278, %v276
    %v337 = vpack.c.b16 %v281, %v279
    %v338 = vpack.c.b16 %v282, %v280
    %v339 = vpack.c.b16 %v285, %v283
    %v340 = vpack.c.b16 %v286, %v284
    %v341 = vpack.c.b16 %v289, %v287
    %v342 = vpack.c.b16 %v290, %v288
    %v343 = vpack.c.b16 %v293, %v291
    %v344 = vpack.c.b16 %v294, %v292
    %v345 = vpack.c.b16 %v297, %v295
    %v346 = vpack.c.b16 %v298, %v296
    %395 = vmatprep.subr.bf16.mxu0 %v300
    %396 = vmatpush1.bf16.msra.mxu0 %v299
    %397 = vmatprep.subr.bf16.mxu0 %v302
    %398 = vmatpush1.bf16.msra.mxu0 %v301
    %399 = vmatprep.subr.bf16.mxu0 %v304
    %400 = vmatpush1.bf16.msra.mxu0 %v303
    %401 = vmatprep.subr.bf16.mxu0 %v306
    %402 = vmatpush1.bf16.msra.mxu0 %v305
    %403 = vmatprep.subr.bf16.mxu0 %v308
    %404 = vmatpush1.bf16.msra.mxu0 %v307
    %405 = vmatprep.subr.bf16.mxu0 %v310
    %406 = vmatpush1.bf16.msra.mxu0 %v309
    %407 = vmatprep.subr.bf16.mxu0 %v312
    %408 = vmatpush1.bf16.msra.mxu0 %v311
    %409 = vmatprep.subr.bf16.mxu0 %v314
    %410 = vmatpush1.bf16.msra.mxu0 %v313
    %411 = vmatprep.subr.bf16.mxu0 %v316
    %412 = vmatpush1.bf16.msra.mxu0 %v315
    %413 = vmatprep.subr.bf16.mxu0 %v318
    %414 = vmatpush1.bf16.msra.mxu0 %v317
    %415 = vmatprep.subr.bf16.mxu0 %v320
    %416 = vmatpush1.bf16.msra.mxu0 %v319
    %417 = vmatprep.subr.bf16.mxu0 %v322
    %418 = vmatpush1.bf16.msra.mxu0 %v321
    %419 = vmatprep.subr.bf16.mxu0 %v324
    %420 = vmatpush1.bf16.msra.mxu0 %v323
    %421 = vmatprep.subr.bf16.mxu0 %v326
    %422 = vmatpush1.bf16.msra.mxu0 %v325
    %423 = vmatprep.subr.bf16.mxu0 %v328
    %424 = vmatpush1.bf16.msra.mxu0 %v327
    %425 = vmatprep.subr.bf16.mxu0 %v330
    %426 = vmatpush1.bf16.msra.mxu0 %v329
    %427 = vmatprep.mubr.bf16.mxu0 %v144
    %428 = vmatmul.mubr.bf16.gmra.mrb[0].mxu0 %v143
    %v429 = vpop.f32.mrb[0].mxu0
    %v430 = vadd.f32 %v116, %v429
    %v431 = vpop.f32.mrb[0].mxu0
    %v432 = vadd.f32 %v120, %v431
    %v433 = vpop.f32.mrb[0].mxu0
    %v434 = vadd.f32 %v116, %v433
    %v435 = vpop.f32.mrb[0].mxu0
    %v436 = vadd.f32 %v120, %v435
    %437 = vmatprep.mubr.bf16.mxu0 %v147
    %438 = vmatmul.mubr.bf16.gmra.mrb[0].mxu0 %v146
    %v439 = vpop.f32.mrb[0].mxu0
    %v440 = vadd.f32 %v116, %v439
    %v441 = vpop.f32.mrb[0].mxu0
    %v442 = vadd.f32 %v120, %v441
    %v443 = vpop.f32.mrb[0].mxu0
    %v444 = vadd.f32 %v116, %v443
    %v445 = vpop.f32.mrb[0].mxu0
    %v446 = vadd.f32 %v120, %v445
    %447 = vdwg.mxu0
    %448 = vmatprep.subr.bf16.mxu0 %v332
    %449 = vmatpush1.bf16.msra.mxu0 %v331
    %450 = vmatprep.subr.bf16.mxu0 %v334
    %451 = vmatpush1.bf16.msra.mxu0 %v333
    %452 = vmatprep.subr.bf16.mxu0 %v336
    %453 = vmatpush1.bf16.msra.mxu0 %v335
    %454 = vmatprep.subr.bf16.mxu0 %v338
    %455 = vmatpush1.bf16.msra.mxu0 %v337
    %456 = vmatprep.subr.bf16.mxu0 %v340
    %457 = vmatpush1.bf16.msra.mxu0 %v339
    %458 = vmatprep.subr.bf16.mxu0 %v342
    %459 = vmatpush1.bf16.msra.mxu0 %v341
    %460 = vmatprep.subr.bf16.mxu0 %v344
    %461 = vmatpush1.bf16.msra.mxu0 %v343
    %462 = vmatprep.subr.bf16.mxu0 %v346
    %463 = vmatpush1.bf16.msra.mxu0 %v345
    %464 = vmatprep.subr.bf16.mxu0 0
    %465 = vmatpush1.bf16.msra.mxu0 0
    %466 = vmatprep.subr.bf16.mxu0 0
    %467 = vmatpush1.bf16.msra.mxu0 0
    %468 = vmatprep.subr.bf16.mxu0 0
    %469 = vmatpush1.bf16.msra.mxu0 0
    %470 = vmatprep.subr.bf16.mxu0 0
    %471 = vmatpush1.bf16.msra.mxu0 0
    %472 = vmatprep.subr.bf16.mxu0 0
    %473 = vmatpush1.bf16.msra.mxu0 0
    %474 = vmatprep.subr.bf16.mxu0 0
    %475 = vmatpush1.bf16.msra.mxu0 0
    %476 = vmatprep.subr.bf16.mxu0 0
    %477 = vmatpush1.bf16.msra.mxu0 0
    %478 = vmatprep.subr.bf16.mxu0 0
    %479 = vmatpush1.bf16.msra.mxu0 0
    %480 = vmatprep.mubr.bf16.mxu0 0
    %481 = vmatmul.mubr.bf16.gmra.mrb[0].mxu0 %v145
    %v482 = vpop.f32.mrb[0].mxu0
    %v483 = vadd.f32 %v430, %v482
    %v484 = vpop.f32.mrb[0].mxu0
    %v485 = vadd.f32 %v432, %v484
    %v486 = vpop.f32.mrb[0].mxu0
    %v487 = vadd.f32 %v434, %v486
    %v488 = vpop.f32.mrb[0].mxu0
    %v489 = vadd.f32 %v436, %v488
    %490 = vmatprep.mubr.bf16.mxu0 0
    %491 = vmatmul.mubr.bf16.gmra.mrb[0].mxu0 %v148
    %v492 = vpop.f32.mrb[0].mxu0
    %v493 = vadd.f32 %v440, %v492
    %v494 = vpop.f32.mrb[0].mxu0
    %v495 = vadd.f32 %v442, %v494
    %v496 = vpop.f32.mrb[0].mxu0
    %v497 = vadd.f32 %v444, %v496
    %v498 = vpop.f32.mrb[0].mxu0
    %v499 = vadd.f32 %v446, %v498
    %500 = vdwg.mxu0
    %v501 = vmax.f32 %v483, 0.0
    %v502 = vmax.f32 %v485, 0.0
    %v503 = vmax.f32 %v487, 0.0
    %v504 = vmax.f32 %v489, 0.0
    %v505 = vmax.f32 %v493, 0.0
    %v506 = vmax.f32 %v495, 0.0
    %v507 = vmax.f32 %v497, 0.0
    %v508 = vmax.f32 %v499, 0.0
    %v509 = vadd.f32 %v501, %v502
    %510 = vadd.xlane.f32.xlu0 %v509
    %v511 = vpop.xlane.xlu0 %510
    %v512 = vadd.f32 %v503, %v504
    %513 = vadd.xlane.f32.xlu0 %v512
    %v514 = vpop.xlane.xlu0 %513
    %v515 = vadd.f32 %v505, %v506
    %516 = vadd.xlane.f32.xlu0 %v515
    %v517 = vpop.xlane.xlu0 %516
    %v518 = vadd.f32 %v507, %v508
    %519 = vadd.xlane.f32.xlu0 %v518
    %v520 = vpop.xlane.xlu0 %519
    %v521 = vmul.f32 %v511, 0.00390625
    %v522 = vmul.f32 %v514, 0.00390625
    %v523 = vmul.f32 %v517, 0.00390625
    %v524 = vmul.f32 %v520, 0.00390625
    %v525 = vmul.f32 %v501, %v501
    %v526 = vmul.f32 %v502, %v502
    %v527 = vmul.f32 %v503, %v503
    %v528 = vmul.f32 %v504, %v504
    %v529 = vmul.f32 %v505, %v505
    %v530 = vmul.f32 %v506, %v506
    %v531 = vmul.f32 %v507, %v507
    %v532 = vmul.f32 %v508, %v508
    %v533 = vadd.f32 %v525, %v526
    %534 = vadd.xlane.f32.xlu0 %v533
    %v535 = vpop.xlane.xlu0 %534
    %v536 = vadd.f32 %v527, %v528
    %537 = vadd.xlane.f32.xlu0 %v536
    %v538 = vpop.xlane.xlu0 %537
    %v539 = vadd.f32 %v529, %v530
    %540 = vadd.xlane.f32.xlu0 %v539
    %v541 = vpop.xlane.xlu0 %540
    %v542 = vadd.f32 %v531, %v532
    %543 = vadd.xlane.f32.xlu0 %v542
    %v544 = vpop.xlane.xlu0 %543
    %v545 = vmul.f32 %v535, 0.00390625
    %v546 = vmul.f32 %v538, 0.00390625
    %v547 = vmul.f32 %v541, 0.00390625
    %v548 = vmul.f32 %v544, 0.00390625
    %v549 = vmul.f32 %v521, %v521
    %v550 = vmul.f32 %v522, %v522
    %v551 = vmul.f32 %v523, %v523
    %v552 = vmul.f32 %v524, %v524
    %v553 = vsub.f32 %v545, %v549
    %v554 = vsub.f32 %v546, %v550
    %v555 = vsub.f32 %v547, %v551
    %v556 = vsub.f32 %v548, %v552
    %v557 = vsub.f32 %v501, %v521
    %v558 = vsub.f32 %v502, %v521
    %v559 = vsub.f32 %v503, %v522
    %v560 = vsub.f32 %v504, %v522
    %v561 = vsub.f32 %v505, %v523
    %v562 = vsub.f32 %v506, %v523
    %v563 = vsub.f32 %v507, %v524
    %v564 = vsub.f32 %v508, %v524
    %v565 = vadd.f32 %v553, 1e-05
    %v566 = vadd.f32 %v554, 1e-05
    %v567 = vadd.f32 %v555, 1e-05
    %v568 = vadd.f32 %v556, 1e-05
    %v569 = vrsqrt.pop %v565
    %v570 = vrsqrt.pop %v566
    %v571 = vrsqrt.pop %v567
    %v572 = vrsqrt.pop %v568
    %v573 = vmul.f32 %v557, %v569
    %v574 = vmul.f32 %v558, %v569
    %v575 = vmul.f32 %v559, %v570
    %v576 = vmul.f32 %v560, %v570
    %v577 = vmul.f32 %v561, %v571
    %v578 = vmul.f32 %v562, %v571
    %v579 = vmul.f32 %v563, %v572
    %v580 = vmul.f32 %v564, %v572
    %s581 = scalar_lea.vmem [#allocation7], 1
    %v582 = vld [vmem:[%s581] ss:$8 sm:$0x3]
    %v584 = vlaneseq
    %v585 = vshrl.u32 %v584, 7
    %v586 = vsub.s32 0, %v585
    %v587 = vrot.slane %v582, %v586
    %v588 = vlaneseq
    %v589 = vshrl.u32 %v588, 7
    %v590 = vsub.s32 1, %v589
    %v591 = vrot.slane %v582, %v590
    %v594 = vmul.f32 %v573, %v587
    %v595 = vmul.f32 %v574, %v591
    %v596 = vmul.f32 %v575, %v587
    %v597 = vmul.f32 %v576, %v591
    %v598 = vmul.f32 %v577, %v587
    %v599 = vmul.f32 %v578, %v591
    %v600 = vmul.f32 %v579, %v587
    %v601 = vmul.f32 %v580, %v591
    %s602 = scalar_lea.vmem [#allocation7], 2
    %v603 = vld [vmem:[%s602] ss:$8 sm:$0x3]
    %v605 = vlaneseq
    %v606 = vshrl.u32 %v605, 7
    %v607 = vsub.s32 0, %v606
    %v608 = vrot.slane %v603, %v607
    %v609 = vlaneseq
    %v610 = vshrl.u32 %v609, 7
    %v611 = vsub.s32 1, %v610
    %v612 = vrot.slane %v603, %v611
    %v615 = vadd.f32 %v594, %v608
    %v616 = vadd.f32 %v595, %v612
    %v617 = vadd.f32 %v596, %v608
    %v618 = vadd.f32 %v597, %v612
    %v619 = vadd.f32 %v598, %v608
    %v620 = vadd.f32 %v599, %v612
    %v621 = vadd.f32 %v600, %v608
    %v622 = vadd.f32 %v601, %v612
    %623 = vst [vmem:[#allocation8] sm:$0xff] %v615
    %624 = vst [vmem:[#allocation8 + $0x8] sm:$0xff] %v616
    %625 = vst [vmem:[#allocation8 + $0x10] sm:$0xff] %v617
    %626 = vst [vmem:[#allocation8 + $0x18] sm:$0xff] %v618
    %627 = vst [vmem:[#allocation8 + $0x20] sm:$0xff] %v619
    %628 = vst [vmem:[#allocation8 + $0x28] sm:$0xff] %v620
    %629 = vst [vmem:[#allocation8 + $0x30] sm:$0xff] %v621
    %630 = vst [vmem:[#allocation8 + $0x38] sm:$0xff] %v622
    // Predicated region
    $region26: #{tpu_custom_call.1} parent=1 // pred_check
      _
    $region27: #{tpu_custom_call.1} parent=1 // pred_check_branch
      %632 = sbr.rel (0) target = $region29
    $region28: #{tpu_custom_call.1} parent=1 // pred_region
      %s634 = ssub.s32 1024, 1024
      %635 = vsyncadd [#allocation4], %s634
      %s636 = sshll.u32 [#allocation8], 4
      %s637 = int_to_ptr.vmem [resolvable:$true] %s636
      %642 = dma.vmem_to_hbm [thread:$0]  %s637, 1024, %s3, [#allocation4], 256, 256, 16
    $region29: #{tpu_custom_call.1} parent=1 // pred_fallthru
      _
    // Predicated region
    $region30: #{tpu_custom_call.1} parent=1 // pred_check
      _
    $region31: #{tpu_custom_call.1} parent=1 // pred_check_branch
      %644 = sbr.rel (0) target = $region33
    $region32: #{tpu_custom_call.1} parent=1 // pred_region
      %645 = dma.done [#allocation4], 1024
    $region33: #{tpu_custom_call.1} parent=1 // pred_fallthru
      _
    %646 = vsyncpa [#allocation3], 1
    %647 = vsyncpa [#allocation6], 1
    %648 = vsyncpa [#allocation4], 1

</llo_original>
